<compile_context>
chip_gen: v7x
topology: tpu7x:2x2x1
jax: 0.10.0
libtpu: 0.0.40
codegen_flags: <defaults>
</compile_context>

<pallas_src>
import math

import jax
import jax.numpy as jnp
from jax.experimental import pallas as pl
from jax.experimental.pallas import tpu as pltpu


# ------------------------------ small helpers ------------------------------ #

def _round_up(x, m):
    return ((x + m - 1) // m) * m


def _pick_tile_k(k_pad, max_tk=512):
    """Largest multiple of 128 (<= max_tk) that divides k_pad."""
    tk = 128
    for cand in range(128, max_tk + 1, 128):
        if k_pad % cand == 0:
            tk = cand
    return tk


# ------------------------------ Pallas kernel ------------------------------ #

def _make_fused_kernel(layer_type):
    """Encoder matmul (K-tiled, f32 accumulator) + fused projection head."""

    def kernel(*refs):
        # refs = (x, enc_w, enc_b, [p1_w, p1_b, [p2_w, p2_b]], out, acc)
        x_ref, w_ref, b_ref = refs[0], refs[1], refs[2]
        o_ref, acc_ref = refs[-2], refs[-1]
        k = pl.program_id(1)

        @pl.when(k == 0)
        def _init():
            acc_ref[...] = jnp.zeros_like(acc_ref)

        # bf16 x bf16 -> f32 accumulation on the MXU.
        acc_ref[...] += jnp.dot(
            x_ref[...], w_ref[...], preferred_element_type=jnp.float32)

        @pl.when(k == pl.num_programs(1) - 1)
        def _finalize():
            feats = acc_ref[...] + b_ref[...]          # encoder bias, once
            if layer_type == "none":
                out = feats
            else:
                p1w_ref, p1b_ref = refs[3], refs[4]
                h = jnp.dot(feats.astype(p1w_ref.dtype), p1w_ref[...],
                            preferred_element_type=jnp.float32) + p1b_ref[...]
                if layer_type == "linear":
                    out = h
                else:  # mlp: Linear -> ReLU -> Linear
                    p2w_ref, p2b_ref = refs[5], refs[6]
                    h = jnp.maximum(h, 0.0)
                    out = jnp.dot(h.astype(p2w_ref.dtype), p2w_ref[...],
                                  preferred_element_type=jnp.float32) + p2b_ref[...]
            o_ref[...] = out.astype(o_ref.dtype)

    return kernel


def _fused_forward(x_pad, enc_w, enc_b, proj, layer_type, *, tm, tk):
    """x_pad:[M_pad,K_pad] bf16, enc_w:[K_pad,N_pad] bf16 -> [M_pad,N_pad] f32."""
    M_pad, K_pad = x_pad.shape
    N_pad = enc_w.shape[1]
    grid = (M_pad // tm, K_pad // tk)

    in_specs = [
        pl.BlockSpec((tm, tk), lambda i, k: (i, k)),        # x tile
        pl.BlockSpec((tk, N_pad), lambda i, k: (k, 0)),     # encoder weight tile
        pl.BlockSpec((1, N_pad), lambda i, k: (0, 0)),      # encoder bias (resident)
    ]
    for p in proj:  # projection weights/biases stay resident in VMEM
        if p.shape[0] == 1:
            in_specs.append(pl.BlockSpec((1, N_pad), lambda i, k: (0, 0)))
        else:
            in_specs.append(pl.BlockSpec((N_pad, N_pad), lambda i, k: (0, 0)))

    flops = 2 * M_pad * K_pad * N_pad
    if layer_type == "linear":
        flops += 2 * M_pad * N_pad * N_pad
    elif layer_type == "mlp":
        flops += 4 * M_pad * N_pad * N_pad
    bytes_accessed = (
        x_pad.size * x_pad.dtype.itemsize
        + enc_w.size * enc_w.dtype.itemsize
        + enc_b.size * enc_b.dtype.itemsize
        + sum(int(p.size) * p.dtype.itemsize for p in proj)
        + M_pad * N_pad * 4
    )

    return pl.pallas_call(
        _make_fused_kernel(layer_type),
        out_shape=jax.ShapeDtypeStruct((M_pad, N_pad), jnp.float32),
        grid_spec=pltpu.PrefetchScalarGridSpec(
            num_scalar_prefetch=0,
            grid=grid,
            in_specs=in_specs,
            out_specs=pl.BlockSpec((tm, N_pad), lambda i, k: (i, 0)),
            scratch_shapes=[pltpu.VMEM((tm, N_pad), jnp.float32)],
        ),
        compiler_params=pltpu.CompilerParams(
            dimension_semantics=("parallel", "arbitrary"),
            vmem_limit_bytes=64 * 1024 * 1024,
        ),
        cost_estimate=pl.CostEstimate(
            flops=flops, transcendentals=0, bytes_accessed=bytes_accessed),
    )(x_pad, enc_w, enc_b, *proj)


# ------------------------- Parameter construction -------------------------- #

def xavier_uniform(key, shape):
    # nn.init.xavier_uniform_: U(-a, a), a = sqrt(6 / (fan_in + fan_out))
    fan_out, fan_in = shape  # PyTorch Linear weight is [out_features, in_features]
    a = math.sqrt(6.0 / (fan_in + fan_out))
    return jax.random.uniform(key, shape, jnp.float32, minval=-a, maxval=a)


def make_params(key, in_flat, output_dim, layer_type):
    k_enc, k_p1, k_p2 = jax.random.split(key, 3)
    K_pad = _round_up(in_flat, 128)
    N_pad = _round_up(output_dim, 128)
    params = {"output_dim": output_dim}

    # TODO(synk): the real clip_model.encode_image (ViT / ResNet) is an external
    # checkpoint-backed module; modeled here as a synthetic linear image encoder.
    enc_w = jax.random.normal(k_enc, (in_flat, output_dim), jnp.float32) * 0.02
    enc_w_pad = jnp.zeros((K_pad, N_pad), jnp.float32)
    enc_w_pad = enc_w_pad.at[:in_flat, :output_dim].set(enc_w)
    params["enc_w_t"] = enc_w_pad.astype(jnp.bfloat16)          # [K_pad, N_pad]
    params["enc_b"] = jnp.zeros((1, N_pad), jnp.float32)

    if layer_type in ("linear", "mlp"):
        # PyTorch stores weight as [out, in]; kernels consume [in, out].
        w1 = xavier_uniform(k_p1, (output_dim, output_dim))
        w1_pad = jnp.zeros((N_pad, N_pad), jnp.float32)
        w1_pad = w1_pad.at[:output_dim, :output_dim].set(w1.T)
        params["p1_w_t"] = w1_pad.astype(jnp.bfloat16)
        params["p1_b"] = jnp.zeros((1, N_pad), jnp.float32)
    if layer_type == "mlp":
        w2 = xavier_uniform(k_p2, (output_dim, output_dim))
        w2_pad = jnp.zeros((N_pad, N_pad), jnp.float32)
        w2_pad = w2_pad.at[:output_dim, :output_dim].set(w2.T)
        params["p2_w_t"] = w2_pad.astype(jnp.bfloat16)
        params["p2_b"] = jnp.zeros((1, N_pad), jnp.float32)
    return params


# ------------------------------ Forward pass ------------------------------- #

def image_clip_modified_forward(params, x, layer_type="linear"):
    """Mirrors ImageCLIPModified.forward for x in NCHW [B, C, H, W]."""
    if layer_type not in ("none", "linear", "mlp"):
        raise ValueError(f"unknown layer_type: {layer_type}")

    B = x.shape[0]
    x_flat = x.reshape(B, -1).astype(jnp.float32)
    K = x_flat.shape[1]
    K_pad, N_pad = params["enc_w_t"].shape
    output_dim = params["output_dim"]

    # Layout plumbing: pad batch to sublane-full rows, K to the padded weight
    # rows; everything in bf16 for the MXU / HBM bandwidth.
    M_pad = _round_up(max(B, 8), 8)
    if M_pad > 128:
        M_pad = _round_up(M_pad, 128)
        tm = 128
    else:
        tm = M_pad
    x_pad = jnp.zeros((M_pad, K_pad), jnp.bfloat16)
    x_pad = x_pad.at[:B, :K].set(x_flat.astype(jnp.bfloat16))

    tk = _pick_tile_k(K_pad)

    if layer_type == "none":
        proj = ()
    elif layer_type == "linear":
        proj = (params["p1_w_t"], params["p1_b"])
    else:  # mlp
        proj = (params["p1_w_t"], params["p1_b"],
                params["p2_w_t"], params["p2_b"])

    out = _fused_forward(x_pad, params["enc_w_t"], params["enc_b"], proj,
                         layer_type, tm=tm, tk=tk)
    return out[:B, :output_dim]


# -------------------------- Plain-JAX reference ----------------------------- #

def _ref_forward(params, x, layer_type):
    """Same math / same bf16 casts, computed with plain jnp ops."""
    B = x.shape[0]
    output_dim = params["output_dim"]
    x_flat = x.reshape(B, -1)
    K = x_flat.shape[1]
    xb = x_flat.astype(jnp.bfloat16)
    ew = params["enc_w_t"][:K, :output_dim]
    feats = jnp.dot(xb, ew, preferred_element_type=jnp.float32) \
        + params["enc_b"][:, :output_dim]
    if layer_type == "none":
        return feats
    p1w = params["p1_w_t"][:output_dim, :output_dim]
    h = jnp.dot(feats.astype(jnp.bfloat16), p1w,
                preferred_element_type=jnp.float32) + params["p1_b"][:, :output_dim]
    if layer_type == "linear":
        return h
    h = jnp.maximum(h, 0.0)
    p2w = params["p2_w_t"][:output_dim, :output_dim]
    return jnp.dot(h.astype(jnp.bfloat16), p2w,
                   preferred_element_type=jnp.float32) + params["p2_b"][:, :output_dim]


# ---------------------------------- Main ----------------------------------- #

if __name__ == "__main__":
    key = jax.random.PRNGKey(0)
    k_x, k_p = jax.random.split(key)

    B, C, H, W = 2, 3, 16, 16      # NCHW image input (CLIP-style 3-channel)
    OUTPUT_DIM = 32                # clip_model.visual.output_dim (small synthetic)

    x = jax.random.normal(k_x, (B, C, H, W), jnp.float32)

    # layer_type='linear'
    params_lin = make_params(k_p, C * H * W, OUTPUT_DIM, "linear")
    out_lin = image_clip_modified_forward(params_lin, x, layer_type="linear")
    out_lin = jax.block_until_ready(out_lin)
    assert out_lin.shape == (B, OUTPUT_DIM)

    # layer_type='mlp'
    params_mlp = make_params(k_p, C * H * W, OUTPUT_DIM, "mlp")
    out_mlp = image_clip_modified_forward(params_mlp, x, layer_type="mlp")
    out_mlp = jax.block_until_ready(out_mlp)
    assert out_mlp.shape == (B, OUTPUT_DIM)

    # layer_type='none' (encoder features only)
    out_none = image_clip_modified_forward(params_lin, x, layer_type="none")
    out_none = jax.block_until_ready(out_none)
    assert out_none.shape == (B, OUTPUT_DIM)

    # Reference checks (bf16 inputs -> f32 accumulation, so tolerances are
    # bf16-appropriate rather than 1e-4).
    ref_lin = _ref_forward(params_lin, x, "linear")
    ref_mlp = _ref_forward(params_mlp, x, "mlp")
    ref_none = _ref_forward(params_lin, x, "none")
    assert jnp.allclose(out_lin, ref_lin, atol=1e-2, rtol=1e-2)
    assert jnp.allclose(out_mlp, ref_mlp, atol=1e-2, rtol=1e-2)
    assert jnp.allclose(out_none, ref_none, atol=1e-2, rtol=1e-2)

    print("KERNEL_OK")
</pallas_src>

<mosaic_0001>
module attributes {stable_mosaic.version = 11 : i64} {
  func.func @kernel(%arg0: i32, %arg1: i32, %arg2: memref<8x384xbf16, #tpu.memory_space<vmem>>, %arg3: memref<384x128xbf16, #tpu.memory_space<vmem>>, %arg4: memref<1x128xf32, #tpu.memory_space<vmem>>, %arg5: memref<128x128xbf16, #tpu.memory_space<vmem>>, %arg6: memref<1x128xf32, #tpu.memory_space<vmem>>, %arg7: memref<8x128xf32, #tpu.memory_space<vmem>>, %arg8: memref<8x128xf32, #tpu.memory_space<vmem>>) attributes {dimension_semantics = [#tpu.dimension_semantics<parallel>, #tpu.dimension_semantics<arbitrary>], iteration_bounds = array<i64: 1, 2>, scalar_prefetch = 0 : i64, scratch_operands = 1 : i64, tpu.core_type = #tpu.core_type<tc>, window_params = [{transform_indices = @transform_0, window_bounds = array<i64: 8, 384>}, {transform_indices = @transform_1, window_bounds = array<i64: 384, 128>}, {pipeline_mode = #tpu.pipeline_mode<synchronous>, transform_indices = @transform_2, window_bounds = array<i64: 1, 128>}, {pipeline_mode = #tpu.pipeline_mode<synchronous>, transform_indices = @transform_3, window_bounds = array<i64: 128, 128>}, {pipeline_mode = #tpu.pipeline_mode<synchronous>, transform_indices = @transform_4, window_bounds = array<i64: 1, 128>}, {transform_indices = @transform_5, window_bounds = array<i64: 8, 128>}]} {
    %c0_i32 = arith.constant 0 : i32
    %0 = arith.cmpi eq, %arg1, %c0_i32 : i32
    %1 = arith.extui %0 : i1 to i32
    %c0_i32_0 = arith.constant 0 : i32
    %2 = arith.cmpi ne, %1, %c0_i32_0 : i32
    scf.if %2 {
      %cst_9 = arith.constant 0.000000e+00 : f32
      %12 = vector.broadcast %cst_9 : f32 to vector<8x128xf32>
      %c0_10 = arith.constant 0 : index
      %c0_11 = arith.constant 0 : index
      %13 = vector.load %arg8[%c0_10, %c0_11] : memref<8x128xf32, #tpu.memory_space<vmem>>, vector<8x128xf32>
      tpu.vector_store %arg8[%c0_10, %c0_11], %12 {strides = array<i32>} : memref<8x128xf32, #tpu.memory_space<vmem>>, vector<8x128xf32>,
    } else {
    }
    %c0 = arith.constant 0 : index
    %c0_1 = arith.constant 0 : index
    %3 = vector.load %arg8[%c0, %c0_1] : memref<8x128xf32, #tpu.memory_space<vmem>>, vector<8x128xf32>
    %c0_2 = arith.constant 0 : index
    %c0_3 = arith.constant 0 : index
    %4 = vector.load %arg2[%c0_2, %c0_3] : memref<8x384xbf16, #tpu.memory_space<vmem>>, vector<8x384xbf16>
    %c0_4 = arith.constant 0 : index
    %c0_5 = arith.constant 0 : index
    %5 = vector.load %arg3[%c0_4, %c0_5] : memref<384x128xbf16, #tpu.memory_space<vmem>>, vector<384x128xbf16>
    %cst = arith.constant dense<0.000000e+00> : vector<8x128xf32>
    %6 = tpu.matmul %4, %5, %cst {dimension_numbers = #tpu.dot_dimension_numbers<[1], [0], [0], [1], [0, 0, 1, 1], [], []>} : vector<8x384xbf16>, vector<384x128xbf16>, vector<8x128xf32> -> vector<8x128xf32>
    %7 = arith.addf %3, %6 : vector<8x128xf32>
    %c0_6 = arith.constant 0 : index
    %c0_7 = arith.constant 0 : index
    %8 = vector.load %arg8[%c0_6, %c0_7] : memref<8x128xf32, #tpu.memory_space<vmem>>, vector<8x128xf32>
    tpu.vector_store %arg8[%c0_6, %c0_7], %7 {strides = array<i32>} : memref<8x128xf32, #tpu.memory_space<vmem>>, vector<8x128xf32>,
    %c1_i32 = arith.constant 1 : i32
    %9 = arith.cmpi eq, %arg1, %c1_i32 : i32
    %10 = arith.extui %9 : i1 to i32
    %c0_i32_8 = arith.constant 0 : i32
    %11 = arith.cmpi ne, %10, %c0_i32_8 : i32
    scf.if %11 {
      %c0_9 = arith.constant 0 : index
      %c0_10 = arith.constant 0 : index
      %12 = vector.load %arg8[%c0_9, %c0_10] : memref<8x128xf32, #tpu.memory_space<vmem>>, vector<8x128xf32>
      %c0_11 = arith.constant 0 : index
      %c0_12 = arith.constant 0 : index
      %13 = vector.load %arg4[%c0_11, %c0_12] : memref<1x128xf32, #tpu.memory_space<vmem>>, vector<1x128xf32>
      %14 = vector.broadcast %13 : vector<1x128xf32> to vector<8x128xf32>
      %15 = arith.addf %12, %14 : vector<8x128xf32>
      %16 = arith.truncf %15 : vector<8x128xf32> to vector<8x128xbf16>
      %c0_13 = arith.constant 0 : index
      %c0_14 = arith.constant 0 : index
      %17 = vector.load %arg5[%c0_13, %c0_14] : memref<128x128xbf16, #tpu.memory_space<vmem>>, vector<128x128xbf16>
      %cst_15 = arith.constant dense<0.000000e+00> : vector<8x128xf32>
      %18 = tpu.matmul %16, %17, %cst_15 {dimension_numbers = #tpu.dot_dimension_numbers<[1], [0], [0], [1], [0, 0, 1, 1], [], []>} : vector<8x128xbf16>, vector<128x128xbf16>, vector<8x128xf32> -> vector<8x128xf32>
      %c0_16 = arith.constant 0 : index
      %c0_17 = arith.constant 0 : index
      %19 = vector.load %arg6[%c0_16, %c0_17] : memref<1x128xf32, #tpu.memory_space<vmem>>, vector<1x128xf32>
      %20 = vector.broadcast %19 : vector<1x128xf32> to vector<8x128xf32>
      %21 = arith.addf %18, %20 : vector<8x128xf32>
      %c0_18 = arith.constant 0 : index
      %c0_19 = arith.constant 0 : index
      %22 = vector.load %arg7[%c0_18, %c0_19] : memref<8x128xf32, #tpu.memory_space<vmem>>, vector<8x128xf32>
      tpu.vector_store %arg7[%c0_18, %c0_19], %21 {strides = array<i32>} : memref<8x128xf32, #tpu.memory_space<vmem>>, vector<8x128xf32>,
    } else {
    }
    return
  }
  func.func @transform_0(%arg0: i32, %arg1: i32) -> (i32, i32) {
    %c0_i32 = arith.constant 0 : i32
    return %arg0, %arg1 : i32, i32
  }
  func.func @transform_1(%arg0: i32, %arg1: i32) -> (i32, i32) {
    %c0_i32 = arith.constant 0 : i32
    %c0_i32_0 = arith.constant 0 : i32
    return %arg1, %c0_i32 : i32, i32
  }
  func.func @transform_2(%arg0: i32, %arg1: i32) -> (i32, i32) {
    %c0_i32 = arith.constant 0 : i32
    %c0_i32_0 = arith.constant 0 : i32
    %c0_i32_1 = arith.constant 0 : i32
    return %c0_i32, %c0_i32_0 : i32, i32
  }
  func.func @transform_3(%arg0: i32, %arg1: i32) -> (i32, i32) {
    %c0_i32 = arith.constant 0 : i32
    %c0_i32_0 = arith.constant 0 : i32
    %c0_i32_1 = arith.constant 0 : i32
    return %c0_i32, %c0_i32_0 : i32, i32
  }
  func.func @transform_4(%arg0: i32, %arg1: i32) -> (i32, i32) {
    %c0_i32 = arith.constant 0 : i32
    %c0_i32_0 = arith.constant 0 : i32
    %c0_i32_1 = arith.constant 0 : i32
    return %c0_i32, %c0_i32_0 : i32, i32
  }
  func.func @transform_5(%arg0: i32, %arg1: i32) -> (i32, i32) {
    %c0_i32 = arith.constant 0 : i32
    %c0_i32_0 = arith.constant 0 : i32
    return %arg0, %c0_i32 : i32, i32
  }
}

</mosaic_0001>

<llo_original>
// kernel: tpu_custom_call.1
$region0: #{tpu_custom_call.1}
  #allocation0 [shape = 'u32[]', space=smem, size = 0x4, offset = 0x4, fixed_abs, tag = 'smem constant byte address 0x4 - core index']
  #allocation1 [shape = 'u32[144,128]{1,0:T(1,128)}', space=vmem, size = 0x12000, scoped, tag = 'internal scratch']
  #allocation2 [shape = 'f32[8,128]{1,0:T(8,128)}', space=vmem, size = 0x1000, scoped, tag = 'scratch operand']
  %s0 = inlined_call_operand.hbm [shape: bf16[8,768], index: 0, kind: input, shape index: {}]
  %s1 = inlined_call_operand.hbm [shape: bf16[768,128], index: 1, kind: input, shape index: {}]
  %s2 = inlined_call_operand.hbm [shape: f32[1,128], index: 2, kind: input, shape index: {}]
  %s3 = inlined_call_operand.hbm [shape: bf16[128,128], index: 3, kind: input, shape index: {}]
  %s4 = inlined_call_operand.hbm [shape: f32[1,128], index: 4, kind: input, shape index: {}]
  %s5 = inlined_call_operand.hbm [shape: f32[8,128], index: 5, kind: output, shape index: {}]
  %s6 = sld [smem:[#allocation0]]
  $region81: #{tpu_custom_call.1} parent=0
    _
  %s8 = ssub.s32 1, %s6
  %s9 = scalar_select 0, %s8, %s6
  $region1: #{tpu_custom_call.1} parent=0
    #allocation3 [shape = 'u8[12288]{0}', space=vmem, size = 0x3000, scoped, tag = 'input window, operand 0']
    #allocation4 [shape = 's32[2]{0}', space=sflag, size = 0x8, scoped, tag = 'scoped memory for tpu_custom_call.1']
    #allocation5 [shape = 's32[2]{0}', space=sflag, size = 0x8, scoped, tag = 'scoped memory for tpu_custom_call.1']
    #allocation6 [shape = 'u8[196608]{0}', space=vmem, size = 0x30000, scoped, tag = 'input window, operand 1']
    #allocation7 [shape = 's32[2]{0}', space=sflag, size = 0x8, scoped, tag = 'scoped memory for tpu_custom_call.1']
    #allocation8 [shape = 'u8[512]{0}', space=vmem, size = 0x400, scoped, tag = 'input window, operand 2, single buffered']
    #allocation9 [shape = 'u8[32768]{0}', space=vmem, size = 0x8000, scoped, tag = 'input window, operand 3, single buffered']
    #allocation10 [shape = 's32[1]{0}', space=sflag, size = 0x4, scoped, tag = 'scoped memory for tpu_custom_call.1']
    #allocation11 [shape = 'u8[512]{0}', space=vmem, size = 0x400, scoped, tag = 'input window, operand 4, single buffered']
    #allocation12 [shape = 'u8[4096]{0}', space=vmem, size = 0x1000, scoped, tag = 'output window, operand 0, single buffered']
    %10 = vsyncpa [#allocation4], 0
    %s11 = scalar_lea.sflag [#allocation4], 1
    %12 = vsyncpa %s11, 0
    %13 = vsyncpa [#allocation7], 0
    %s14 = scalar_lea.sflag [#allocation7], 1
    %15 = vsyncpa %s14, 0
    %16 = vsyncpa [#allocation10], 0
    %17 = vsyncpa [#allocation5], 0
    loop: start=0, step=1, limit=4
    $region2: #{tpu_custom_call.1} parent=1 // loop_pre_header
      _
    $region3: #{tpu_custom_call.1} parent=1 // loop_header
      %s19 = sphi 0, %s23
      %p20 = scmp.ge.s32.totalorder %s19, 4
      %s26 = sphi 0, %s38
      %s27 = sphi 0, %s34
      %s28 = sphi 0, %s26
      %s29 = sphi 0, %s27
      %s30 = sphi 0, %s28
      %s31 = sphi 0, %s29
      %s43 = sphi 0, %s45
      %s46 = sphi 0, %s43
      %s47 = sphi 0, %s46
      %s63 = sphi 0, %s47
      %s69 = sphi 0, %s71
      %s72 = sphi 0, %s69
      %s73 = sphi 0, %s72
      %s89 = sphi 0, %s73
      %s93 = sphi 0, %s93
      %s95 = sphi 0, %s93
      %s96 = sphi 0, %s95
      %s110 = sphi 0, %s96
      %s114 = sphi 0, %s114
      %s116 = sphi 0, %s114
      %s117 = sphi 0, %s116
      %s131 = sphi 0, %s117
      %s135 = sphi 0, %s135
      %s137 = sphi 0, %s135
      %s138 = sphi 0, %s137
      %s152 = sphi 0, %s138
      %s158 = sphi 0, %s160
      %s161 = sphi 0, %s158
      %s162 = sphi 0, %s161
      %s178 = sphi 0, %s162
    $region4: #{tpu_custom_call.1} parent=1 // loop_header_branch
      %22 = sbr.rel (%p20) target = $region8
    $region5: #{tpu_custom_call.1} parent=1 // loop_body
      %s24 = ssub.s32 %s19, 1
      %s25 = ssub.s32 %s19, 2
      %s32 = sadd.s32 1, %s27
      %p33 = scmp.ge.s32.totalorder %s32, 2
      %s34 = scalar_select %p33, 0, %s32
      %s35 = sadd.s32 1, %s26
      %s36 = scalar_select %p33, %s35, %s26
      %p37 = scmp.ge.s32.totalorder %s36, 1
      %s38 = scalar_select %p37, 0, %s36
      %s39 = ssub.s32 %s26, %s38
      %s40 = ssub.s32 %s27, %s34
      %s41 = sor.u32 %s39, %s40
      %p42 = scmp.eq.s32.totalorder %s41, 0
      %s44 = sadd.s32 %s43, 1
      %s45 = scalar_select %p42, %s43, %s44
      %p48 = pneg %p42
      %p49 = scmp.eq.s32.totalorder %s19, 1
      %p50 = por %p48, %p49
      %p51 = scmp.ne.s32.totalorder %s43, %s46
      %p52 = scmp.eq.s32.totalorder %s19, 0
      %p53 = por %p51, %p52
      %p54 = scmp.ne.s32.totalorder %s43, %s46
      %p55 = scmp.eq.s32.totalorder %s24, 1
      %p56 = por %p54, %p55
      %p57 = scmp.ne.s32.totalorder %s46, %s47
      %p58 = scmp.eq.s32.totalorder %s24, 0
      %p59 = por %p57, %p58
      %p60 = scmp.ne.s32.totalorder %s46, %s47
      %p61 = scmp.eq.s32.totalorder %s25, 1
      %p62 = por %p60, %p61
      %p64 = scmp.ne.s32.totalorder %s47, %s63
      %p65 = scmp.eq.s32.totalorder %s25, 0
      %p66 = por %p64, %p65
      %s67 = ssub.s32 %s27, %s34
      %p68 = scmp.eq.s32.totalorder %s67, 0
      %s70 = sadd.s32 %s69, 1
      %s71 = scalar_select %p68, %s69, %s70
      %p74 = pneg %p68
      %p75 = scmp.eq.s32.totalorder %s19, 1
      %p76 = por %p74, %p75
      %p77 = scmp.ne.s32.totalorder %s69, %s72
      %p78 = scmp.eq.s32.totalorder %s19, 0
      %p79 = por %p77, %p78
      %p80 = scmp.ne.s32.totalorder %s69, %s72
      %p81 = scmp.eq.s32.totalorder %s24, 1
      %p82 = por %p80, %p81
      %p83 = scmp.ne.s32.totalorder %s72, %s73
      %p84 = scmp.eq.s32.totalorder %s24, 0
      %p85 = por %p83, %p84
      %p86 = scmp.ne.s32.totalorder %s72, %s73
      %p87 = scmp.eq.s32.totalorder %s25, 1
      %p88 = por %p86, %p87
      %p90 = scmp.ne.s32.totalorder %s73, %s89
      %p91 = scmp.eq.s32.totalorder %s25, 0
      %p92 = por %p90, %p91
      %s94 = sadd.s32 %s93, 1
      %p97 = scmp.eq.s32.totalorder %s19, 1
      %p98 = scmp.ne.s32.totalorder %s93, %s95
      %p99 = scmp.eq.s32.totalorder %s19, 0
      %p100 = por %p98, %p99
      %p101 = scmp.ne.s32.totalorder %s93, %s95
      %p102 = scmp.eq.s32.totalorder %s24, 1
      %p103 = por %p101, %p102
      %p104 = scmp.ne.s32.totalorder %s95, %s96
      %p105 = scmp.eq.s32.totalorder %s24, 0
      %p106 = por %p104, %p105
      %p107 = scmp.ne.s32.totalorder %s95, %s96
      %p108 = scmp.eq.s32.totalorder %s25, 1
      %p109 = por %p107, %p108
      %p111 = scmp.ne.s32.totalorder %s96, %s110
      %p112 = scmp.eq.s32.totalorder %s25, 0
      %p113 = por %p111, %p112
      %s115 = sadd.s32 %s114, 1
      %p118 = scmp.eq.s32.totalorder %s19, 1
      %p119 = scmp.ne.s32.totalorder %s114, %s116
      %p120 = scmp.eq.s32.totalorder %s19, 0
      %p121 = por %p119, %p120
      %p122 = scmp.ne.s32.totalorder %s114, %s116
      %p123 = scmp.eq.s32.totalorder %s24, 1
      %p124 = por %p122, %p123
      %p125 = scmp.ne.s32.totalorder %s116, %s117
      %p126 = scmp.eq.s32.totalorder %s24, 0
      %p127 = por %p125, %p126
      %p128 = scmp.ne.s32.totalorder %s116, %s117
      %p129 = scmp.eq.s32.totalorder %s25, 1
      %p130 = por %p128, %p129
      %p132 = scmp.ne.s32.totalorder %s117, %s131
      %p133 = scmp.eq.s32.totalorder %s25, 0
      %p134 = por %p132, %p133
      %s136 = sadd.s32 %s135, 1
      %p139 = scmp.eq.s32.totalorder %s19, 1
      %p140 = scmp.ne.s32.totalorder %s135, %s137
      %p141 = scmp.eq.s32.totalorder %s19, 0
      %p142 = por %p140, %p141
      %p143 = scmp.ne.s32.totalorder %s135, %s137
      %p144 = scmp.eq.s32.totalorder %s24, 1
      %p145 = por %p143, %p144
      %p146 = scmp.ne.s32.totalorder %s137, %s138
      %p147 = scmp.eq.s32.totalorder %s24, 0
      %p148 = por %p146, %p147
      %p149 = scmp.ne.s32.totalorder %s137, %s138
      %p150 = scmp.eq.s32.totalorder %s25, 1
      %p151 = por %p149, %p150
      %p153 = scmp.ne.s32.totalorder %s138, %s152
      %p154 = scmp.eq.s32.totalorder %s25, 0
      %p155 = por %p153, %p154
      %s156 = ssub.s32 %s26, %s38
      %p157 = scmp.eq.s32.totalorder %s156, 0
      %s159 = sadd.s32 %s158, 1
      %s160 = scalar_select %p157, %s158, %s159
      %p163 = pneg %p157
      %p164 = scmp.eq.s32.totalorder %s19, 1
      %p165 = por %p163, %p164
      %p166 = scmp.ne.s32.totalorder %s158, %s161
      %p167 = scmp.eq.s32.totalorder %s19, 0
      %p168 = por %p166, %p167
      %p169 = scmp.ne.s32.totalorder %s158, %s161
      %p170 = scmp.eq.s32.totalorder %s24, 1
      %p171 = por %p169, %p170
      %p172 = scmp.ne.s32.totalorder %s161, %s162
      %p173 = scmp.eq.s32.totalorder %s24, 0
      %p174 = por %p172, %p173
      %p175 = scmp.ne.s32.totalorder %s161, %s162
      %p176 = scmp.eq.s32.totalorder %s25, 1
      %p177 = por %p175, %p176
      %p179 = scmp.ne.s32.totalorder %s162, %s178
      %p180 = scmp.eq.s32.totalorder %s25, 0
      %p181 = por %p179, %p180
      %p182 = scmp.le.s32.totalorder 1, %s19
      %p183 = scmp.lt.s32.totalorder %s19, 3
      %p184 = pnand %p182, %p183
      %p185 = pneg %p184
      // Predicated region
      $region9: #{tpu_custom_call.1} parent=5 // pred_check
        _
      $region10: #{tpu_custom_call.1} parent=5 // pred_check_branch
        %187 = sbr.rel (%p184) target = $region12
      $region11: #{tpu_custom_call.1} parent=5 // pred_region
        %s188 = ssub.s32 %s19, 1
        // Predicated region
        $region13: #{tpu_custom_call.1} parent=11 // pred_check
          %p189 = pneg %p106
        $region14: #{tpu_custom_call.1} parent=11 // pred_check_branch
          %191 = sbr.rel (%p189) target = $region16
        $region15: #{tpu_custom_call.1} parent=11 // pred_region
          %s193 = ssub.s32 16, 16
          %194 = vsyncadd [#allocation7], %s193
          %s196 = sshll.u32 [#allocation8], 4
          %s197 = int_to_ptr.vmem [resolvable:$true] %s196
          %199 = dma.hbm_to_vmem [thread:$0]  %s2, 16, %s197, [#allocation7]
        $region16: #{tpu_custom_call.1} parent=11 // pred_fallthru
          _
        // Predicated region
        $region17: #{tpu_custom_call.1} parent=11 // pred_check
          %p200 = pneg %p127
        $region18: #{tpu_custom_call.1} parent=11 // pred_check_branch
          %202 = sbr.rel (%p200) target = $region20
        $region19: #{tpu_custom_call.1} parent=11 // pred_region
          %s204 = ssub.s32 1024, 1024
          %205 = vsyncadd [#allocation10], %s204
          %s206 = sshll.u32 [#allocation9], 4
          %s207 = int_to_ptr.vmem [resolvable:$true] %s206
          %212 = dma.hbm_to_vmem [thread:$0]  %s3, 1024, %s207, [#allocation10], 64, 64, 4
        $region20: #{tpu_custom_call.1} parent=11 // pred_fallthru
          _
        // Predicated region
        $region21: #{tpu_custom_call.1} parent=11 // pred_check
          %p213 = pneg %p148
        $region22: #{tpu_custom_call.1} parent=11 // pred_check_branch
          %215 = sbr.rel (%p213) target = $region24
        $region23: #{tpu_custom_call.1} parent=11 // pred_region
          %s217 = ssub.s32 16, 16
          %218 = vsyncadd [#allocation10], %s217
          %s220 = sshll.u32 [#allocation11], 4
          %s221 = int_to_ptr.vmem [resolvable:$true] %s220
          %223 = dma.hbm_to_vmem [thread:$0]  %s4, 16, %s221, [#allocation10]
        $region24: #{tpu_custom_call.1} parent=11 // pred_fallthru
          _
      $region12: #{tpu_custom_call.1} parent=5 // pred_fallthru
        _
      %p224 = scmp.lt.s32.totalorder %s19, 2
      // Predicated region
      $region25: #{tpu_custom_call.1} parent=5 // pred_check
        %p225 = pneg %p224
      $region26: #{tpu_custom_call.1} parent=5 // pred_check_branch
        %227 = sbr.rel (%p225) target = $region28
      $region27: #{tpu_custom_call.1} parent=5 // pred_region
        // Predicated region
        $region29: #{tpu_custom_call.1} parent=27 // pred_check
          %p228 = pneg %p53
        $region30: #{tpu_custom_call.1} parent=27 // pred_check_branch
          %230 = sbr.rel (%p228) target = $region32
        $region31: #{tpu_custom_call.1} parent=27 // pred_region
          %s231 = sand.u32 %s43, 1
          %s232 = scalar_lea.sflag [#allocation4], %s231
          %s233 = sand.u32 %s43, 1
          %s234 = smul.addr %s233, 12
          %s235 = scalar_lea.vmem [#allocation3], %s234
          %s236 = smul.u32 3, %s27
          %s238 = ssub.s32 192, 192
          %239 = vsyncadd %s232, %s238
          %s240 = smul.addr %s26, 6
          %s241 = sadd.s32 %s236, %s240
          %s242 = smul.addr %s241, 64
          %s243 = scalar_lea.hbm %s0, %s242
          %s245 = sshll.u32 %s235, 4
          %s246 = int_to_ptr.vmem [resolvable:$true] %s245
          %248 = dma.hbm_to_vmem [thread:$0]  %s243, 192, %s246, %s232
        $region32: #{tpu_custom_call.1} parent=27 // pred_fallthru
          _
        // Predicated region
        $region33: #{tpu_custom_call.1} parent=27 // pred_check
          %p249 = pneg %p79
        $region34: #{tpu_custom_call.1} parent=27 // pred_check_branch
          %251 = sbr.rel (%p249) target = $region36
        $region35: #{tpu_custom_call.1} parent=27 // pred_region
          %s252 = sand.u32 %s19, 1
          %s253 = scalar_lea.sflag [#allocation7], %s252
          %s254 = sand.u32 %s69, 1
          %s255 = smul.addr %s254, 192
          %s256 = scalar_lea.vmem [#allocation6], %s255
          %s257 = smul.u32 48, %s27
          %s259 = ssub.s32 3072, 3072
          %260 = vsyncadd %s253, %s259
          %s261 = smul.addr %s257, 64
          %s262 = scalar_lea.hbm %s1, %s261
          %s263 = sshll.u32 %s256, 4
          %s264 = int_to_ptr.vmem [resolvable:$true] %s263
          %269 = dma.hbm_to_vmem [thread:$0]  %s262, 3072, %s264, %s253, 64, 64, 4
        $region36: #{tpu_custom_call.1} parent=27 // pred_fallthru
          _
      $region28: #{tpu_custom_call.1} parent=5 // pred_fallthru
        _
      %p270 = scmp.le.s32.totalorder 1, %s19
      %p271 = scmp.lt.s32.totalorder %s19, 3
      %p272 = pnand %p270, %p271
      %p273 = pneg %p272
      // Predicated region
      $region37: #{tpu_custom_call.1} parent=5 // pred_check
        _
      $region38: #{tpu_custom_call.1} parent=5 // pred_check_branch
        %275 = sbr.rel (%p272) target = $region40
      $region39: #{tpu_custom_call.1} parent=5 // pred_region
        %s276 = ssub.s32 %s19, 1
        %s277 = sand.u32 %s46, 1
        %s278 = scalar_lea.sflag [#allocation4], %s277
        %s279 = sand.u32 %s46, 1
        %s280 = smul.addr %s279, 12
        %s281 = scalar_lea.vmem [#allocation3], %s280
        // Predicated region
        $region41: #{tpu_custom_call.1} parent=39 // pred_check
          %p282 = pneg %p59
        $region42: #{tpu_custom_call.1} parent=39 // pred_check_branch
          %284 = sbr.rel (%p282) target = $region44
        $region43: #{tpu_custom_call.1} parent=39 // pred_region
          %285 = dma.done %s278, 192
        $region44: #{tpu_custom_call.1} parent=39 // pred_fallthru
          _
        %s286 = sand.u32 %s24, 1
        %s287 = scalar_lea.sflag [#allocation7], %s286
        %s288 = sand.u32 %s72, 1
        %s289 = smul.addr %s288, 192
        %s290 = scalar_lea.vmem [#allocation6], %s289
        // Predicated region
        $region45: #{tpu_custom_call.1} parent=39 // pred_check
          %p291 = pneg %p85
        $region46: #{tpu_custom_call.1} parent=39 // pred_check_branch
          %293 = sbr.rel (%p291) target = $region48
        $region47: #{tpu_custom_call.1} parent=39 // pred_region
          %294 = dma.done %s287, 3072
        $region48: #{tpu_custom_call.1} parent=39 // pred_fallthru
          _
        // Predicated region
        $region49: #{tpu_custom_call.1} parent=39 // pred_check
          %p295 = pneg %p106
        $region50: #{tpu_custom_call.1} parent=39 // pred_check_branch
          %297 = sbr.rel (%p295) target = $region52
        $region51: #{tpu_custom_call.1} parent=39 // pred_region
          %298 = dma.done [#allocation7], 16
        $region52: #{tpu_custom_call.1} parent=39 // pred_fallthru
          _
        // Predicated region
        $region53: #{tpu_custom_call.1} parent=39 // pred_check
          %p299 = pneg %p127
        $region54: #{tpu_custom_call.1} parent=39 // pred_check_branch
          %301 = sbr.rel (%p299) target = $region56
        $region55: #{tpu_custom_call.1} parent=39 // pred_region
          %302 = dma.done [#allocation10], 1024
        $region56: #{tpu_custom_call.1} parent=39 // pred_fallthru
          _
        // Predicated region
        $region57: #{tpu_custom_call.1} parent=39 // pred_check
          %p303 = pneg %p148
        $region58: #{tpu_custom_call.1} parent=39 // pred_check_branch
          %305 = sbr.rel (%p303) target = $region60
        $region59: #{tpu_custom_call.1} parent=39 // pred_region
          %306 = dma.done [#allocation10], 16
        $region60: #{tpu_custom_call.1} parent=39 // pred_fallthru
          _
        %s307 = sand.u32 %s46, 1
        %s308 = scalar_lea.sflag [#allocation4], %s307
        %s309 = sand.u32 %s46, 1
        %s310 = smul.addr %s309, 12
        %s311 = scalar_lea.vmem [#allocation3], %s310
        %p312 = pneg %p59
        %p313 = pneg %p56
        %s314 = sand.u32 %s24, 1
        %s315 = scalar_lea.sflag [#allocation7], %s314
        %s316 = sand.u32 %s72, 1
        %s317 = smul.addr %s316, 192
        %s318 = scalar_lea.vmem [#allocation6], %s317
        %p319 = pneg %p85
        %p320 = pneg %p82
        %p321 = pneg %p106
        %p322 = pneg %p103
        %p323 = pneg %p127
        %p324 = pneg %p124
        %p325 = pneg %p148
        %p326 = pneg %p145
        %p327 = pneg %p174
        %p328 = pneg %p171
        %s329 = smul.u32 3, %s29
        %s330 = smul.u32 48, %s29
        %p332 = scmp.eq.s32.totalorder %s29, 0
        // Predicated region
        $region61: #{tpu_custom_call.1} parent=39 // pred_check
          %p333 = pneg %p332
        $region62: #{tpu_custom_call.1} parent=39 // pred_check_branch
          %335 = sbr.rel (%p333) target = $region64
        $region63: #{tpu_custom_call.1} parent=39 // pred_region
          %336 = vst [vmem:[#allocation2] sm:$0xff] 0.0
        $region64: #{tpu_custom_call.1} parent=39 // pred_fallthru
          _
        %v337 = vld [vmem:[#allocation2] sm:$0xff]
        %v338 = vld [vmem:[%s281] sm:$0xff]
        %v339 = vld [vmem:[%s281 + $0x8] sm:$0xf]
        %v340 = vld [vmem:[%s290] sm:$0xf]
        %v341 = vld [vmem:[%s290 + $0x4] sm:$0xf]
        %v342 = vld [vmem:[%s290 + $0x8] sm:$0xf]
        %v343 = vld [vmem:[%s290 + $0xc] sm:$0xf]
        %v344 = vld [vmem:[%s290 + $0x10] sm:$0xf]
        %v345 = vld [vmem:[%s290 + $0x14] sm:$0xf]
        %v346 = vld [vmem:[%s290 + $0x18] sm:$0xf]
        %v347 = vld [vmem:[%s290 + $0x1c] sm:$0xf]
        %v348 = vld [vmem:[%s290 + $0x20] sm:$0xf]
        %v349 = vld [vmem:[%s290 + $0x24] sm:$0xf]
        %v350 = vld [vmem:[%s290 + $0x28] sm:$0xf]
        %v351 = vld [vmem:[%s290 + $0x2c] sm:$0xf]
        %v352 = vld [vmem:[%s290 + $0x30] sm:$0xf]
        %v353 = vld [vmem:[%s290 + $0x34] sm:$0xf]
        %v354 = vld [vmem:[%s290 + $0x38] sm:$0xf]
        %v355 = vld [vmem:[%s290 + $0x3c] sm:$0xf]
        %v356 = vld [vmem:[%s290 + $0x40] sm:$0xf]
        %v357 = vld [vmem:[%s290 + $0x44] sm:$0xf]
        %v358 = vld [vmem:[%s290 + $0x48] sm:$0xf]
        %v359 = vld [vmem:[%s290 + $0x4c] sm:$0xf]
        %v360 = vld [vmem:[%s290 + $0x50] sm:$0xf]
        %v361 = vld [vmem:[%s290 + $0x54] sm:$0xf]
        %v362 = vld [vmem:[%s290 + $0x58] sm:$0xf]
        %v363 = vld [vmem:[%s290 + $0x5c] sm:$0xf]
        %v364 = vld [vmem:[%s290 + $0x60] sm:$0xf]
        %v365 = vld [vmem:[%s290 + $0x64] sm:$0xf]
        %v366 = vld [vmem:[%s290 + $0x68] sm:$0xf]
        %v367 = vld [vmem:[%s290 + $0x6c] sm:$0xf]
        %v368 = vld [vmem:[%s290 + $0x70] sm:$0xf]
        %v369 = vld [vmem:[%s290 + $0x74] sm:$0xf]
        %v370 = vld [vmem:[%s290 + $0x78] sm:$0xf]
        %v371 = vld [vmem:[%s290 + $0x7c] sm:$0xf]
        %v372 = vld [vmem:[%s290 + $0x80] sm:$0xf]
        %v373 = vld [vmem:[%s290 + $0x84] sm:$0xf]
        %v374 = vld [vmem:[%s290 + $0x88] sm:$0xf]
        %v375 = vld [vmem:[%s290 + $0x8c] sm:$0xf]
        %v376 = vld [vmem:[%s290 + $0x90] sm:$0xf]
        %v377 = vld [vmem:[%s290 + $0x94] sm:$0xf]
        %v378 = vld [vmem:[%s290 + $0x98] sm:$0xf]
        %v379 = vld [vmem:[%s290 + $0x9c] sm:$0xf]
        %v380 = vld [vmem:[%s290 + $0xa0] sm:$0xf]
        %v381 = vld [vmem:[%s290 + $0xa4] sm:$0xf]
        %v382 = vld [vmem:[%s290 + $0xa8] sm:$0xf]
        %v383 = vld [vmem:[%s290 + $0xac] sm:$0xf]
        %v384 = vld [vmem:[%s290 + $0xb0] sm:$0xf]
        %v385 = vld [vmem:[%s290 + $0xb4] sm:$0xf]
        %v386 = vld [vmem:[%s290 + $0xb8] sm:$0xf]
        %v387 = vld [vmem:[%s290 + $0xbc] sm:$0xf]
        %v390 = vunpack.c.l.b16 %v338
        %v391 = vunpack.c.h.b16 %v338
        %v392 = vunpack.c.l.b16 %v339
        %v393 = vpack.c.b16 %v390, %v390
        %v394 = vpack.c.b16 %v391, %v391
        %v395 = vpack.c.b16 %v392, %v392
        %v447 = vunpack.c.l.b16 %v340
        %v448 = vunpack.c.l.b16 %v341
        %v449 = vunpack.c.l.b16 %v342
        %v450 = vunpack.c.l.b16 %v343
        %v451 = vunpack.c.l.b16 %v344
        %v452 = vunpack.c.l.b16 %v345
        %v453 = vunpack.c.l.b16 %v346
        %v454 = vunpack.c.l.b16 %v347
        %v455 = vunpack.c.l.b16 %v348
        %v456 = vunpack.c.l.b16 %v349
        %v457 = vunpack.c.l.b16 %v350
        %v458 = vunpack.c.l.b16 %v351
        %v459 = vunpack.c.l.b16 %v352
        %v460 = vunpack.c.l.b16 %v353
        %v461 = vunpack.c.l.b16 %v354
        %v462 = vunpack.c.l.b16 %v355
        %v463 = vunpack.c.l.b16 %v356
        %v464 = vunpack.c.l.b16 %v357
        %v465 = vunpack.c.l.b16 %v358
        %v466 = vunpack.c.l.b16 %v359
        %v467 = vunpack.c.l.b16 %v360
        %v468 = vunpack.c.l.b16 %v361
        %v469 = vunpack.c.l.b16 %v362
        %v470 = vunpack.c.l.b16 %v363
        %v471 = vunpack.c.l.b16 %v364
        %v472 = vunpack.c.l.b16 %v365
        %v473 = vunpack.c.l.b16 %v366
        %v474 = vunpack.c.l.b16 %v367
        %v475 = vunpack.c.l.b16 %v368
        %v476 = vunpack.c.l.b16 %v369
        %v477 = vunpack.c.l.b16 %v370
        %v478 = vunpack.c.l.b16 %v371
        %v479 = vunpack.c.l.b16 %v372
        %v480 = vunpack.c.l.b16 %v373
        %v481 = vunpack.c.l.b16 %v374
        %v482 = vunpack.c.l.b16 %v375
        %v483 = vunpack.c.l.b16 %v376
        %v484 = vunpack.c.l.b16 %v377
        %v485 = vunpack.c.l.b16 %v378
        %v486 = vunpack.c.l.b16 %v379
        %v487 = vunpack.c.l.b16 %v380
        %v488 = vunpack.c.l.b16 %v381
        %v489 = vunpack.c.l.b16 %v382
        %v490 = vunpack.c.l.b16 %v383
        %v491 = vunpack.c.l.b16 %v384
        %v492 = vunpack.c.l.b16 %v385
        %v493 = vunpack.c.l.b16 %v386
        %v494 = vunpack.c.l.b16 %v387
        %v495 = vpack.c.b16 %v448, %v447
        %v496 = vpack.c.b16 %v450, %v449
        %v497 = vpack.c.b16 %v452, %v451
        %v498 = vpack.c.b16 %v454, %v453
        %v499 = vpack.c.b16 %v456, %v455
        %v500 = vpack.c.b16 %v458, %v457
        %v501 = vpack.c.b16 %v460, %v459
        %v502 = vpack.c.b16 %v462, %v461
        %v503 = vpack.c.b16 %v464, %v463
        %v504 = vpack.c.b16 %v466, %v465
        %v505 = vpack.c.b16 %v468, %v467
        %v506 = vpack.c.b16 %v470, %v469
        %v507 = vpack.c.b16 %v472, %v471
        %v508 = vpack.c.b16 %v474, %v473
        %v509 = vpack.c.b16 %v476, %v475
        %v510 = vpack.c.b16 %v478, %v477
        %v511 = vpack.c.b16 %v480, %v479
        %v512 = vpack.c.b16 %v482, %v481
        %v513 = vpack.c.b16 %v484, %v483
        %v514 = vpack.c.b16 %v486, %v485
        %v515 = vpack.c.b16 %v488, %v487
        %v516 = vpack.c.b16 %v490, %v489
        %v517 = vpack.c.b16 %v492, %v491
        %v518 = vpack.c.b16 %v494, %v493
        %543 = vmatprep.subr.bf16.mxu0 0
        %544 = vmatpush1.bf16.msra.mxu0 %v495
        %545 = vmatprep.subr.bf16.mxu0 0
        %546 = vmatpush1.bf16.msra.mxu0 %v496
        %547 = vmatprep.subr.bf16.mxu0 0
        %548 = vmatpush1.bf16.msra.mxu0 %v497
        %549 = vmatprep.subr.bf16.mxu0 0
        %550 = vmatpush1.bf16.msra.mxu0 %v498
        %551 = vmatprep.subr.bf16.mxu0 0
        %552 = vmatpush1.bf16.msra.mxu0 %v499
        %553 = vmatprep.subr.bf16.mxu0 0
        %554 = vmatpush1.bf16.msra.mxu0 %v500
        %555 = vmatprep.subr.bf16.mxu0 0
        %556 = vmatpush1.bf16.msra.mxu0 %v501
        %557 = vmatprep.subr.bf16.mxu0 0
        %558 = vmatpush1.bf16.msra.mxu0 %v502
        %559 = vmatprep.subr.bf16.mxu0 0
        %560 = vmatpush1.bf16.msra.mxu0 %v503
        %561 = vmatprep.subr.bf16.mxu0 0
        %562 = vmatpush1.bf16.msra.mxu0 %v504
        %563 = vmatprep.subr.bf16.mxu0 0
        %564 = vmatpush1.bf16.msra.mxu0 %v505
        %565 = vmatprep.subr.bf16.mxu0 0
        %566 = vmatpush1.bf16.msra.mxu0 %v506
        %567 = vmatprep.subr.bf16.mxu0 0
        %568 = vmatpush1.bf16.msra.mxu0 %v507
        %569 = vmatprep.subr.bf16.mxu0 0
        %570 = vmatpush1.bf16.msra.mxu0 %v508
        %571 = vmatprep.subr.bf16.mxu0 0
        %572 = vmatpush1.bf16.msra.mxu0 %v509
        %573 = vmatprep.subr.bf16.mxu0 0
        %574 = vmatpush1.bf16.msra.mxu0 %v510
        %575 = vmatprep.mubr.bf16.mxu0 %v394
        %576 = vmatmul.mubr.bf16.gmra.mrb[0].mxu0 %v393
        %v577 = vpop.f32.mrb[0].mxu0
        %v578 = vadd.f32 0.0, %v577
        %v579 = vpop.f32.mrb[0].mxu0
        %v580 = vpop.f32.mrb[0].mxu0
        %v581 = vpop.f32.mrb[0].mxu0
        %582 = vdwg.mxu0
        %583 = vmatprep.subr.bf16.mxu0 0
        %584 = vmatpush1.bf16.msra.mxu0 %v511
        %585 = vmatprep.subr.bf16.mxu0 0
        %586 = vmatpush1.bf16.msra.mxu0 %v512
        %587 = vmatprep.subr.bf16.mxu0 0
        %588 = vmatpush1.bf16.msra.mxu0 %v513
        %589 = vmatprep.subr.bf16.mxu0 0
        %590 = vmatpush1.bf16.msra.mxu0 %v514
        %591 = vmatprep.subr.bf16.mxu0 0
        %592 = vmatpush1.bf16.msra.mxu0 %v515
        %593 = vmatprep.subr.bf16.mxu0 0
        %594 = vmatpush1.bf16.msra.mxu0 %v516
        %595 = vmatprep.subr.bf16.mxu0 0
        %596 = vmatpush1.bf16.msra.mxu0 %v517
        %597 = vmatprep.subr.bf16.mxu0 0
        %598 = vmatpush1.bf16.msra.mxu0 %v518
        %599 = vmatprep.subr.bf16.mxu0 0
        %600 = vmatpush1.bf16.msra.mxu0 0
        %601 = vmatprep.subr.bf16.mxu0 0
        %602 = vmatpush1.bf16.msra.mxu0 0
        %603 = vmatprep.subr.bf16.mxu0 0
        %604 = vmatpush1.bf16.msra.mxu0 0
        %605 = vmatprep.subr.bf16.mxu0 0
        %606 = vmatpush1.bf16.msra.mxu0 0
        %607 = vmatprep.subr.bf16.mxu0 0
        %608 = vmatpush1.bf16.msra.mxu0 0
        %609 = vmatprep.subr.bf16.mxu0 0
        %610 = vmatpush1.bf16.msra.mxu0 0
        %611 = vmatprep.subr.bf16.mxu0 0
        %612 = vmatpush1.bf16.msra.mxu0 0
        %613 = vmatprep.subr.bf16.mxu0 0
        %614 = vmatpush1.bf16.msra.mxu0 0
        %615 = vmatprep.mubr.bf16.mxu0 0
        %616 = vmatmul.mubr.bf16.gmra.mrb[0].mxu0 %v395
        %v617 = vpop.f32.mrb[0].mxu0
        %v618 = vadd.f32 %v578, %v617
        %v619 = vpop.f32.mrb[0].mxu0
        %v620 = vpop.f32.mrb[0].mxu0
        %v621 = vpop.f32.mrb[0].mxu0
        %622 = vdwg.mxu0
        %v623 = vadd.f32 %v337, %v618
        %624 = vst [vmem:[#allocation2] sm:$0xff] %v623
        %p625 = scmp.eq.s32.totalorder %s29, 1
        // Predicated region
        $region65: #{tpu_custom_call.1} parent=39 // pred_check
          %p626 = pneg %p625
        $region66: #{tpu_custom_call.1} parent=39 // pred_check_branch
          %628 = sbr.rel (%p626) target = $region68
        $region67: #{tpu_custom_call.1} parent=39 // pred_region
          %v629 = vld [vmem:[#allocation2] sm:$0xff]
          %v630 = vld [vmem:[#allocation8] sm:$0x1]
          %v632 = vlaneseq
          %v633 = vshrl.u32 %v632, 7
          %v634 = vsub.s32 0, %v633
          %v635 = vrot.slane %v630, %v634
          %v637 = vadd.f32 %v629, %v635
          %v638 = vpack.c.bf16 %v637, %v637
          %v639 = vld [vmem:[#allocation9] sm:$0xf]
          %v640 = vld [vmem:[#allocation9 + $0x4] sm:$0xf]
          %v641 = vld [vmem:[#allocation9 + $0x8] sm:$0xf]
          %v642 = vld [vmem:[#allocation9 + $0xc] sm:$0xf]
          %v643 = vld [vmem:[#allocation9 + $0x10] sm:$0xf]
          %v644 = vld [vmem:[#allocation9 + $0x14] sm:$0xf]
          %v645 = vld [vmem:[#allocation9 + $0x18] sm:$0xf]
          %v646 = vld [vmem:[#allocation9 + $0x1c] sm:$0xf]
          %v647 = vld [vmem:[#allocation9 + $0x20] sm:$0xf]
          %v648 = vld [vmem:[#allocation9 + $0x24] sm:$0xf]
          %v649 = vld [vmem:[#allocation9 + $0x28] sm:$0xf]
          %v650 = vld [vmem:[#allocation9 + $0x2c] sm:$0xf]
          %v651 = vld [vmem:[#allocation9 + $0x30] sm:$0xf]
          %v652 = vld [vmem:[#allocation9 + $0x34] sm:$0xf]
          %v653 = vld [vmem:[#allocation9 + $0x38] sm:$0xf]
          %v654 = vld [vmem:[#allocation9 + $0x3c] sm:$0xf]
          %v655 = vld [vmem:[#allocation11] sm:$0x1]
          %v657 = vlaneseq
          %v658 = vshrl.u32 %v657, 7
          %v659 = vsub.s32 0, %v658
          %v660 = vrot.slane %v655, %v659
          %v678 = vunpack.c.l.b16 %v639
          %v679 = vunpack.c.l.b16 %v640
          %v680 = vunpack.c.l.b16 %v641
          %v681 = vunpack.c.l.b16 %v642
          %v682 = vunpack.c.l.b16 %v643
          %v683 = vunpack.c.l.b16 %v644
          %v684 = vunpack.c.l.b16 %v645
          %v685 = vunpack.c.l.b16 %v646
          %v686 = vunpack.c.l.b16 %v647
          %v687 = vunpack.c.l.b16 %v648
          %v688 = vunpack.c.l.b16 %v649
          %v689 = vunpack.c.l.b16 %v650
          %v690 = vunpack.c.l.b16 %v651
          %v691 = vunpack.c.l.b16 %v652
          %v692 = vunpack.c.l.b16 %v653
          %v693 = vunpack.c.l.b16 %v654
          %v694 = vpack.c.b16 %v679, %v678
          %v695 = vpack.c.b16 %v681, %v680
          %v696 = vpack.c.b16 %v683, %v682
          %v697 = vpack.c.b16 %v685, %v684
          %v698 = vpack.c.b16 %v687, %v686
          %v699 = vpack.c.b16 %v689, %v688
          %v700 = vpack.c.b16 %v691, %v690
          %v701 = vpack.c.b16 %v693, %v692
          %710 = vmatprep.subr.bf16.mxu0 0
          %711 = vmatpush1.bf16.msra.mxu0 %v694
          %712 = vmatprep.subr.bf16.mxu0 0
          %713 = vmatpush1.bf16.msra.mxu0 %v695
          %714 = vmatprep.subr.bf16.mxu0 0
          %715 = vmatpush1.bf16.msra.mxu0 %v696
          %716 = vmatprep.subr.bf16.mxu0 0
          %717 = vmatpush1.bf16.msra.mxu0 %v697
          %718 = vmatprep.subr.bf16.mxu0 0
          %719 = vmatpush1.bf16.msra.mxu0 %v698
          %720 = vmatprep.subr.bf16.mxu0 0
          %721 = vmatpush1.bf16.msra.mxu0 %v699
          %722 = vmatprep.subr.bf16.mxu0 0
          %723 = vmatpush1.bf16.msra.mxu0 %v700
          %724 = vmatprep.subr.bf16.mxu0 0
          %725 = vmatpush1.bf16.msra.mxu0 %v701
          %726 = vmatprep.subr.bf16.mxu0 0
          %727 = vmatpush1.bf16.msra.mxu0 0
          %728 = vmatprep.subr.bf16.mxu0 0
          %729 = vmatpush1.bf16.msra.mxu0 0
          %730 = vmatprep.subr.bf16.mxu0 0
          %731 = vmatpush1.bf16.msra.mxu0 0
          %732 = vmatprep.subr.bf16.mxu0 0
          %733 = vmatpush1.bf16.msra.mxu0 0
          %734 = vmatprep.subr.bf16.mxu0 0
          %735 = vmatpush1.bf16.msra.mxu0 0
          %736 = vmatprep.subr.bf16.mxu0 0
          %737 = vmatpush1.bf16.msra.mxu0 0
          %738 = vmatprep.subr.bf16.mxu0 0
          %739 = vmatpush1.bf16.msra.mxu0 0
          %740 = vmatprep.subr.bf16.mxu0 0
          %741 = vmatpush1.bf16.msra.mxu0 0
          %742 = vmatprep.mubr.bf16.mxu0 0
          %743 = vmatmul.mubr.bf16.gmra.mrb[0].mxu0 %v638
          %v744 = vpop.f32.mrb[0].mxu0
          %v745 = vadd.f32 %v660, %v744
          %v746 = vpop.f32.mrb[0].mxu0
          %v747 = vpop.f32.mrb[0].mxu0
          %v748 = vpop.f32.mrb[0].mxu0
          %749 = vdwg.mxu0
          %750 = vst [vmem:[#allocation12] sm:$0xff] %v745
        $region68: #{tpu_custom_call.1} parent=39 // pred_fallthru
          _
        // Predicated region
        $region69: #{tpu_custom_call.1} parent=39 // pred_check
          %p751 = pneg %p171
        $region70: #{tpu_custom_call.1} parent=39 // pred_check_branch
          %753 = sbr.rel (%p751) target = $region72
        $region71: #{tpu_custom_call.1} parent=39 // pred_region
          %s755 = ssub.s32 128, 128
          %756 = vsyncadd [#allocation5], %s755
          %s757 = smul.addr %s28, 128
          %s758 = scalar_lea.hbm %s5, %s757
          %s760 = sshll.u32 [#allocation12], 4
          %s761 = int_to_ptr.vmem [resolvable:$true] %s760
          %763 = dma.vmem_to_hbm [thread:$0]  %s761, 128, %s758, [#allocation5]
        $region72: #{tpu_custom_call.1} parent=39 // pred_fallthru
          _
        // Predicated region
        $region73: #{tpu_custom_call.1} parent=39 // pred_check
          %p764 = pneg %p171
        $region74: #{tpu_custom_call.1} parent=39 // pred_check_branch
          %766 = sbr.rel (%p764) target = $region76
        $region75: #{tpu_custom_call.1} parent=39 // pred_region
          %767 = dma.done [#allocation5], 128
        $region76: #{tpu_custom_call.1} parent=39 // pred_fallthru
          _
      $region40: #{tpu_custom_call.1} parent=5 // pred_fallthru
        _
      %p768 = scmp.le.s32.totalorder 2, %s19
      // Predicated region
      $region77: #{tpu_custom_call.1} parent=5 // pred_check
        %p769 = pneg %p768
      $region78: #{tpu_custom_call.1} parent=5 // pred_check_branch
        %771 = sbr.rel (%p769) target = $region80
      $region79: #{tpu_custom_call.1} parent=5 // pred_region
        %s772 = ssub.s32 %s19, 2
      $region80: #{tpu_custom_call.1} parent=5 // pred_fallthru
        _
    $region6: #{tpu_custom_call.1} parent=1 // loop_footer
      %s23 = sadd.s32 1, %s19
    $region7: #{tpu_custom_call.1} parent=1 // loop_footer_branch
      %18 = sbr.rel target = $region3
    $region8: #{tpu_custom_call.1} parent=1 // loop_exit
      _
    %773 = vsyncpa [#allocation4], 1
    %s774 = scalar_lea.sflag [#allocation4], 1
    %775 = vsyncpa %s774, 1
    %776 = vsyncpa [#allocation7], 1
    %s777 = scalar_lea.sflag [#allocation7], 1
    %778 = vsyncpa %s777, 1
    %779 = vsyncpa [#allocation10], 1
    %780 = vsyncpa [#allocation5], 1
    %s781 = scalar_lea.sflag [#allocation5], 1
    %782 = vsyncpa %s781, 1

</llo_original>
